<compile_context>
chip_gen: v7x
topology: tpu7x:2x2x1
jax: 0.10.0
libtpu: 0.0.40
codegen_flags: <defaults>
</compile_context>

<pallas_src>
import functools
import math

import jax
import jax.numpy as jnp
from jax.experimental import pallas as pl
from jax.experimental.pallas import tpu as pltpu


def layer_norm_kernel(ab_ref, x_ref, o_ref, *, eps, d):
    """ab_ref: (2,) SMEM [alpha, bias]; x_ref/o_ref: (TM, D) VMEM tiles (native dtype)."""
    x = x_ref[...].astype(jnp.float32)                    # fused up-cast (2 B/elt in HBM for bf16)
    alpha = ab_ref[0]
    bias = ab_ref[1]

    mean = jnp.mean(x, axis=-1, keepdims=True)            # (TM, 1)
    diff = x - mean
    # torch.std default is unbiased -> divide by (D - 1); d == 1 -> NaN like torch.
    inv_dm1 = (1.0 / (d - 1)) if d > 1 else float("nan")
    var = jnp.sum(diff * diff, axis=-1, keepdims=True) * inv_dm1
    std = jnp.sqrt(var)
    # Fold alpha AND mean into a per-row affine: one divide per row, then a single
    # mul+add per element; `diff` is not live past the variance reduction.
    scale = alpha / (std + eps)                           # (TM, 1)
    shift = bias - mean * scale                           # (TM, 1)
    o_ref[...] = (x * scale + shift).astype(o_ref.dtype)  # fused down-cast on store


def _round_up(x, m):
    return ((x + m - 1) // m) * m


def _round_down(x, m):
    return (x // m) * m


def _choose_tile(n: int, d: int, in_itemsize: int) -> int:
    """VMEM-budget-aware row tile: ~2 MiB per input tile, multiple of 8, cdiv grid."""
    if n <= 8:
        return n                      # full-dim block shape is always layout-legal
    # Size against f32 compute temporaries so bf16 inputs (up-cast in kernel) also fit.
    target_bytes = 2 << 20
    per_row = d * max(in_itemsize, 4)
    tm = max(8, _round_down(target_bytes // per_row, 8))
    # v7x has 2 TensorCores: never collapse medium/large N to a single grid step.
    if n >= 64:
        tm = min(tm, max(8, _round_down(pl.cdiv(n, 2), 8)))
    # Don't exceed the row count (rounded down to 8 so the block stays (8,*)-aligned;
    # the last grid step simply handles a partial block).
    tm = min(tm, max(8, _round_down(n, 8)))
    return tm


def layer_norm(x, alpha, bias, *, eps: float = 1e-6):
    """Pallas LayerNormalization forward. Normalizes over the last dim of x."""
    orig_shape = x.shape
    orig_dtype = x.dtype
    d = orig_shape[-1]
    n = math.prod(orig_shape[:-1])
    x2 = x.reshape(n, d)              # keep native dtype; cast happens inside the kernel

    itemsize = jnp.dtype(orig_dtype).itemsize
    tm = _choose_tile(n, d, itemsize)
    grid = (pl.cdiv(n, tm),)

    # Pipeline VMEM: 2 input + 2 output double-buffers (native dtype) + f32 compute headroom.
    buf_bytes = 4 * tm * d * itemsize + 2 * tm * d * 4
    vmem_limit = int(min(max(32 << 20, buf_bytes + (4 << 20)), 48 << 20))

    ab = jnp.stack([jnp.asarray(alpha, jnp.float32).reshape(()),
                    jnp.asarray(bias, jnp.float32).reshape(())])   # (2,) scalars

    # TODO(synk): for D < 128, packing 128//D rows per lane-row (segmented reduction)
    # would make loads/stores lane-dense; skipped here to keep the layout simple.
    out = pl.pallas_call(
        functools.partial(layer_norm_kernel, eps=eps, d=d),
        out_shape=jax.ShapeDtypeStruct((n, d), orig_dtype),
        grid=grid,
        in_specs=[
            pl.BlockSpec(memory_space=pltpu.MemorySpace.SMEM),   # [alpha, bias]
            pl.BlockSpec((tm, d), lambda i: (i, 0)),             # x row-tile (native dtype)
        ],
        out_specs=pl.BlockSpec((tm, d), lambda i: (i, 0)),
        compiler_params=pltpu.CompilerParams(
            dimension_semantics=("parallel",),                   # dual-TC v7x shards rows
            vmem_limit_bytes=vmem_limit),
    )(ab, x2)
    return out.reshape(orig_shape)


def layer_norm_ref(x, alpha, bias, *, eps: float = 1e-6):
    """Pure-JAX reference mirroring the PyTorch module exactly (compute in f32)."""
    xf = x.astype(jnp.float32)
    mean = jnp.mean(xf, axis=-1, keepdims=True)
    std = jnp.std(xf, axis=-1, keepdims=True, ddof=1)   # unbiased, like torch .std()
    return (alpha * (xf - mean) / (std + eps) + bias).astype(x.dtype)


if __name__ == "__main__":
    key = jax.random.PRNGKey(0)
    k1, k2, k3 = jax.random.split(key, 3)

    # Small shape consistent with the transformer usage: (batch, seq, d_model)
    B, S, D = 2, 8, 32
    x = jax.random.normal(k1, (B, S, D), jnp.float32)

    # 1) default-initialized parameters (torch init: alpha=1, bias=0)
    out = jax.block_until_ready(layer_norm(x, 1.0, 0.0))
    ref = layer_norm_ref(x, 1.0, 0.0)
    assert out.shape == (B, S, D) and out.dtype == x.dtype
    assert jnp.allclose(out, ref, atol=1e-5, rtol=1e-5), "mismatch (default params)"

    # 2) non-trivial learned scalars to verify alpha/bias actually flow through
    alpha, bias = 1.3, -0.25
    out2 = jax.block_until_ready(layer_norm(x, alpha, bias))
    ref2 = layer_norm_ref(x, alpha, bias)
    assert jnp.allclose(out2, ref2, atol=1e-5, rtol=1e-5), "mismatch (learned params)"

    # 3) larger shape exercising the tiled (grid >= 2) path
    x_big = jax.random.normal(k2, (4, 512, 256), jnp.float32)   # N = 2048 rows
    out3 = jax.block_until_ready(layer_norm(x_big, alpha, bias))
    ref3 = layer_norm_ref(x_big, alpha, bias)
    assert out3.shape == x_big.shape
    assert jnp.allclose(out3, ref3, atol=1e-5, rtol=1e-5), "mismatch (tiled path)"

    # 4) bf16 input: fused in-kernel cast, output dtype preserved (matches torch)
    x_bf = jax.random.normal(k3, (B, S, D), jnp.float32).astype(jnp.bfloat16)
    out4 = jax.block_until_ready(layer_norm(x_bf, alpha, bias))
    ref4 = layer_norm_ref(x_bf, alpha, bias)
    assert out4.dtype == jnp.bfloat16
    assert jnp.allclose(out4.astype(jnp.float32), ref4.astype(jnp.float32),
                        atol=3e-2, rtol=3e-2), "mismatch (bf16 path)"

    print("KERNEL_OK")
</pallas_src>

<mosaic_0001>
module attributes {stable_mosaic.version = 11 : i64} {
  func.func @layer_norm_kernel(%arg0: i32, %arg1: memref<2xf32, #tpu.memory_space<smem>>, %arg2: memref<16x32xf32, #tpu.memory_space<vmem>>, %arg3: memref<16x32xf32, #tpu.memory_space<vmem>>) attributes {dimension_semantics = [#tpu.dimension_semantics<parallel>], iteration_bounds = array<i64: 1>, scalar_prefetch = 0 : i64, scratch_operands = 0 : i64, tpu.core_type = #tpu.core_type<tc>, window_params = [{transform_indices = @transform_0, window_bounds = array<i64: 2>}, {transform_indices = @transform_1, window_bounds = array<i64: 16, 32>}, {transform_indices = @transform_2, window_bounds = array<i64: 16, 32>}]} {
    %c0 = arith.constant 0 : index
    %c0_0 = arith.constant 0 : index
    %0 = vector.load %arg2[%c0, %c0_0] : memref<16x32xf32, #tpu.memory_space<vmem>>, vector<16x32xf32>
    %c0_1 = arith.constant 0 : index
    %1 = memref.load %arg1[%c0_1] : memref<2xf32, #tpu.memory_space<smem>>
    %c1 = arith.constant 1 : index
    %2 = memref.load %arg1[%c1] : memref<2xf32, #tpu.memory_space<smem>>
    %cst = arith.constant dense<0.000000e+00> : vector<16xf32>
    %3 = vector.multi_reduction <add>, %0, %cst [1] : vector<16x32xf32> to vector<16xf32>
    %4 = vector.shape_cast %3 : vector<16xf32> to vector<16x1xf32>
    %cst_2 = arith.constant 3.200000e+01 : f32
    %5 = vector.broadcast %cst_2 : f32 to vector<16x1xf32>
    %6 = arith.divf %4, %5 : vector<16x1xf32>
    %7 = vector.broadcast %6 : vector<16x1xf32> to vector<16x32xf32>
    %8 = arith.subf %0, %7 : vector<16x32xf32>
    %9 = arith.mulf %8, %8 : vector<16x32xf32>
    %cst_3 = arith.constant dense<0.000000e+00> : vector<16xf32>
    %10 = vector.multi_reduction <add>, %9, %cst_3 [1] : vector<16x32xf32> to vector<16xf32>
    %11 = vector.shape_cast %10 : vector<16xf32> to vector<16x1xf32>
    %cst_4 = arith.constant 0.0322580636 : f32
    %12 = vector.broadcast %cst_4 : f32 to vector<16x1xf32>
    %13 = arith.mulf %11, %12 : vector<16x1xf32>
    %14 = math.sqrt %13 : vector<16x1xf32>
    %cst_5 = arith.constant 9.99999997E-7 : f32
    %15 = vector.broadcast %cst_5 : f32 to vector<16x1xf32>
    %16 = arith.addf %14, %15 : vector<16x1xf32>
    %17 = vector.broadcast %1 : f32 to vector<16x1xf32>
    %18 = arith.divf %17, %16 : vector<16x1xf32>
    %19 = arith.mulf %6, %18 : vector<16x1xf32>
    %20 = vector.broadcast %2 : f32 to vector<16x1xf32>
    %21 = arith.subf %20, %19 : vector<16x1xf32>
    %22 = vector.broadcast %18 : vector<16x1xf32> to vector<16x32xf32>
    %23 = arith.mulf %0, %22 : vector<16x32xf32>
    %24 = vector.broadcast %21 : vector<16x1xf32> to vector<16x32xf32>
    %25 = arith.addf %23, %24 : vector<16x32xf32>
    %c0_6 = arith.constant 0 : index
    %c0_7 = arith.constant 0 : index
    %26 = vector.load %arg3[%c0_6, %c0_7] : memref<16x32xf32, #tpu.memory_space<vmem>>, vector<16x32xf32>
    tpu.vector_store %arg3[%c0_6, %c0_7], %25 {strides = array<i32>} : memref<16x32xf32, #tpu.memory_space<vmem>>, vector<16x32xf32>,
    return
  }
  func.func @transform_0(%arg0: i32) -> i32 {
    %c0_i32 = arith.constant 0 : i32
    %c0_i32_0 = arith.constant 0 : i32
    return %c0_i32 : i32
  }
  func.func @transform_1(%arg0: i32) -> (i32, i32) {
    %c0_i32 = arith.constant 0 : i32
    %c0_i32_0 = arith.constant 0 : i32
    return %arg0, %c0_i32 : i32, i32
  }
  func.func @transform_2(%arg0: i32) -> (i32, i32) {
    %c0_i32 = arith.constant 0 : i32
    %c0_i32_0 = arith.constant 0 : i32
    return %arg0, %c0_i32 : i32, i32
  }
}

</mosaic_0001>

<llo_original>
// kernel: tpu_custom_call.1
$region0: #{tpu_custom_call.1}
  #allocation0 [shape = 'u32[]', space=smem, size = 0x4, offset = 0x4, fixed_abs, tag = 'smem constant byte address 0x4 - core index']
  #allocation1 [shape = 'u32[144,128]{1,0:T(1,128)}', space=vmem, size = 0x12000, scoped, tag = 'internal scratch']
  %s0 = inlined_call_operand.hbm [shape: f32[2], index: 0, kind: input, shape index: {}]
  %s1 = inlined_call_operand.hbm [shape: f32[16,32], index: 1, kind: input, shape index: {}]
  %s2 = inlined_call_operand.hbm [shape: f32[16,32], index: 2, kind: output, shape index: {}]
  %s3 = sld [smem:[#allocation0]]
  $region26: #{tpu_custom_call.1} parent=0
    _
  %s5 = ssub.s32 1, %s3
  %s6 = scalar_select 0, %s5, %s3
  $region1: #{tpu_custom_call.1} parent=0
    #allocation2 [shape = 'u8[512]{0}', space=smem, size = 0x200, scoped, tag = 'input window, operand 0, single buffered']
    #allocation3 [shape = 's32[1]{0}', space=sflag, size = 0x4, scoped, tag = 'scoped memory for tpu_custom_call.1']
    #allocation4 [shape = 's32[1]{0}', space=sflag, size = 0x4, scoped, tag = 'scoped memory for tpu_custom_call.1']
    #allocation5 [shape = 's32[1]{0}', space=sflag, size = 0x4, scoped, tag = 'scoped memory for tpu_custom_call.1']
    #allocation6 [shape = 'u8[8192]{0}', space=vmem, size = 0x2000, scoped, tag = 'input window, operand 1, single buffered']
    #allocation7 [shape = 'u8[8192]{0}', space=vmem, size = 0x2000, scoped, tag = 'output window, operand 0, single buffered']
    %7 = vsyncpa [#allocation5], 0
    %8 = vsyncpa [#allocation3], 0
    %9 = vsyncpa [#allocation4], 0
    // Predicated region
    $region2: #{tpu_custom_call.1} parent=1 // pred_check
      _
    $region3: #{tpu_custom_call.1} parent=1 // pred_check_branch
      %11 = sbr.rel (0) target = $region5
    $region4: #{tpu_custom_call.1} parent=1 // pred_region
      %s13 = ssub.s32 16, 16
      %14 = vsyncadd [#allocation5], %s13
      %17 = dma.hbm_to_smem %s0, 16, [#allocation2], [#allocation5]
    $region5: #{tpu_custom_call.1} parent=1 // pred_fallthru
      _
    // Predicated region
    $region6: #{tpu_custom_call.1} parent=1 // pred_check
      _
    $region7: #{tpu_custom_call.1} parent=1 // pred_check_branch
      %19 = sbr.rel (0) target = $region9
    $region8: #{tpu_custom_call.1} parent=1 // pred_region
      %s21 = ssub.s32 256, 256
      %22 = vsyncadd [#allocation3], %s21
      %s23 = sshll.u32 [#allocation6], 4
      %s24 = int_to_ptr.vmem [resolvable:$true] %s23
      %29 = dma.hbm_to_vmem [thread:$0]  %s1, 256, %s24, [#allocation3], 128, 128, 8
    $region9: #{tpu_custom_call.1} parent=1 // pred_fallthru
      _
    // Predicated region
    $region10: #{tpu_custom_call.1} parent=1 // pred_check
      _
    $region11: #{tpu_custom_call.1} parent=1 // pred_check_branch
      %31 = sbr.rel (0) target = $region13
    $region12: #{tpu_custom_call.1} parent=1 // pred_region
      %32 = dma.done [#allocation5], 16
    $region13: #{tpu_custom_call.1} parent=1 // pred_fallthru
      _
    // Predicated region
    $region14: #{tpu_custom_call.1} parent=1 // pred_check
      _
    $region15: #{tpu_custom_call.1} parent=1 // pred_check_branch
      %34 = sbr.rel (0) target = $region17
    $region16: #{tpu_custom_call.1} parent=1 // pred_region
      %35 = dma.done [#allocation3], 256
    $region17: #{tpu_custom_call.1} parent=1 // pred_fallthru
      _
    %36 = sfence
    %v37 = vld [vmem:[#allocation6] sm:$0xff]
    %v38 = vld [vmem:[#allocation6 + $0x8] sm:$0xff]
    %s39 = sld [smem:[#allocation2]]
    %s40 = sld [smem:[#allocation2 + $0x1]]
    %vm41 = vcmask 261120
    %v42 = vsel %vm41, %v37, 0.0
    %43 = vadd.xlane.f32.xlu0 %v42
    %v44 = vpop.xlane.xlu0 %43
    %v45 = vsel %vm41, %v38, 0.0
    %46 = vadd.xlane.f32.xlu0 %v45
    %v47 = vpop.xlane.xlu0 %46
    %v48 = vrcp.pop 32.0
    %v49 = vmul.f32 %v44, %v48
    %v50 = vmul.f32 %v47, %v48
    %v51 = vsub.f32 %v37, %v49
    %v52 = vsub.f32 %v38, %v50
    %v53 = vmul.f32 %v51, %v51
    %v54 = vmul.f32 %v52, %v52
    %v55 = vsel %vm41, %v53, 0.0
    %56 = vadd.xlane.f32.xlu0 %v55
    %v57 = vpop.xlane.xlu0 %56
    %v58 = vsel %vm41, %v54, 0.0
    %59 = vadd.xlane.f32.xlu0 %v58
    %v60 = vpop.xlane.xlu0 %59
    %v61 = vmul.f32 %v57, 0.032258064
    %v62 = vmul.f32 %v60, 0.032258064
    %v63 = vrsqrt.pop %v61
    %v64 = vmul.f32 %v61, %v63
    %vm65 = vcmp.eq.f32.partialorder %v61, inf
    %v66 = vsel %vm65, %v61, %v64
    %vm67 = vcmp.eq.f32.partialorder %v61, 0.0
    %v68 = vand.u32 %v61, 2147483648
    %v69 = vsel %vm67, %v68, %v66
    %v70 = vrsqrt.pop %v62
    %v71 = vmul.f32 %v62, %v70
    %vm72 = vcmp.eq.f32.partialorder %v62, inf
    %v73 = vsel %vm72, %v62, %v71
    %vm74 = vcmp.eq.f32.partialorder %v62, 0.0
    %v75 = vand.u32 %v62, 2147483648
    %v76 = vsel %vm74, %v75, %v73
    %v77 = vadd.f32 %v69, 1e-06
    %v78 = vadd.f32 %v76, 1e-06
    %v79 = vstv %s39
    %v80 = vrcp.pop %v77
    %v81 = vmul.f32 %v79, %v80
    %v82 = vrcp.pop %v78
    %v83 = vmul.f32 %v79, %v82
    %v84 = vmul.f32 %v49, %v81
    %v85 = vmul.f32 %v50, %v83
    %v86 = vstv %s40
    %v87 = vsub.f32 %v86, %v84
    %v88 = vsub.f32 %v86, %v85
    %v89 = vmul.f32 %v37, %v81
    %v90 = vmul.f32 %v38, %v83
    %v91 = vadd.f32 %v89, %v87
    %v92 = vadd.f32 %v90, %v88
    %93 = vst.msk [vmem:[#allocation7] sm:$0xff] %vm41, %v91
    %94 = vst.msk [vmem:[#allocation7 + $0x8] sm:$0xff] %vm41, %v92
    // Predicated region
    $region18: #{tpu_custom_call.1} parent=1 // pred_check
      _
    $region19: #{tpu_custom_call.1} parent=1 // pred_check_branch
      %96 = sbr.rel (0) target = $region21
    $region20: #{tpu_custom_call.1} parent=1 // pred_region
      %s98 = ssub.s32 256, 256
      %99 = vsyncadd [#allocation4], %s98
      %s100 = sshll.u32 [#allocation7], 4
      %s101 = int_to_ptr.vmem [resolvable:$true] %s100
      %106 = dma.vmem_to_hbm [thread:$0]  %s101, 256, %s2, [#allocation4], 128, 128, 8
    $region21: #{tpu_custom_call.1} parent=1 // pred_fallthru
      _
    // Predicated region
    $region22: #{tpu_custom_call.1} parent=1 // pred_check
      _
    $region23: #{tpu_custom_call.1} parent=1 // pred_check_branch
      %108 = sbr.rel (0) target = $region25
    $region24: #{tpu_custom_call.1} parent=1 // pred_region
      %109 = dma.done [#allocation4], 256
    $region25: #{tpu_custom_call.1} parent=1 // pred_fallthru
      _
    %110 = vsyncpa [#allocation3], 1
    %111 = vsyncpa [#allocation4], 1
    %112 = vsyncpa [#allocation5], 1

</llo_original>
